<compile_context>
chip_gen: v7x
topology: tpu7x:2x2x1
jax: 0.10.0
libtpu: 0.0.40
codegen_flags: <defaults>
</compile_context>

<pallas_src>
import jax
import jax.numpy as jnp
from jax.experimental import pallas as pl
from jax.experimental.pallas import tpu as pltpu

_LANE = 128     # lane granule (last dim)
_SUBLANE = 8    # f32 sublane granule (second-to-last dim)


def _round_up(n: int, m: int) -> int:
    return ((n + m - 1) // m) * m


def _vmem_budget_bytes():
    """Generation-aware per-TensorCore VMEM budgets.

    Returns (data_budget, vmem_limit): `data_budget` is what our own buffers may
    use (leaves headroom for Mosaic scratch), `vmem_limit` is passed to the
    compiler via vmem_limit_bytes.  Note: with a "parallel" batch axis the
    resident weights are duplicated in both v7x TensorCores, so budgeting per
    core is the correct (conservative) choice.
    """
    try:
        cap = int(pltpu.get_tpu_info().vmem_capacity_bytes)
    except Exception:
        cap = 64 * 1024 * 1024          # v7x-safe fallback (64 MiB per TC)
    cap = max(cap, 16 * 1024 * 1024)
    data_budget = (cap * 3) // 4        # ~48 MiB v7x, ~96 MiB v5e/v6e
    vmem_limit = (cap * 7) // 8
    return data_budget, vmem_limit


# ----------------------------- kernels -------------------------------------


def _mlp_kernel(x_ref, w1_ref, b1_ref, w2_ref, b2_ref, o_ref):
    # hidden = x @ W1 + b1   (f32 MXU accumulation; hidden kept in f32)
    h = jnp.dot(x_ref[...], w1_ref[...], preferred_element_type=jnp.float32)
    h = h + b1_ref[...]
    # out = hidden @ W2 + b2
    out = jnp.dot(h, w2_ref[...], preferred_element_type=jnp.float32)
    out = out + b2_ref[...]
    o_ref[...] = out.astype(o_ref.dtype)


def _mlp_kernel_ktiled(x_ref, w1_ref, b1_ref, w2_ref, b2_ref, o_ref, acc_ref):
    # Fallback path: hidden dim tiled on grid axis 1 ("arbitrary"), f32 VMEM acc.
    k = pl.program_id(1)

    @pl.when(k == 0)
    def _():
        acc_ref[...] = jnp.zeros_like(acc_ref)

    h = jnp.dot(x_ref[...], w1_ref[...], preferred_element_type=jnp.float32)
    h = h + b1_ref[...]
    acc_ref[...] += jnp.dot(h, w2_ref[...], preferred_element_type=jnp.float32)

    @pl.when(k == pl.num_programs(1) - 1)
    def _():
        o_ref[...] = (acc_ref[...] + b2_ref[...]).astype(o_ref.dtype)


# ----------------------------- wrapper --------------------------------------


def prepare_params(w1, b1, w2, b2):
    """One-time zero-padding of weights/biases to 128-lane granules.

    Do this OUTSIDE the per-call forward (padding is mathematically transparent
    for the GEMMs; padded output columns are sliced off after the kernel).
    """
    d_in, hidden = w1.shape
    d_out = w2.shape[1]
    d_in_p = _round_up(d_in, _LANE)
    hid_p = _round_up(hidden, _LANE)
    d_out_p = _round_up(d_out, _LANE)
    w1_p = jnp.pad(w1, ((0, d_in_p - d_in), (0, hid_p - hidden)))
    b1_p = jnp.pad(b1, (0, hid_p - hidden)).reshape(1, hid_p)
    w2_p = jnp.pad(w2, ((0, hid_p - hidden), (0, d_out_p - d_out)))
    b2_p = jnp.pad(b2, (0, d_out_p - d_out)).reshape(1, d_out_p)
    return (w1_p, b1_p, w2_p, b2_p), (d_in, hidden, d_out)


def baseline_model_forward(x, padded_params, dims, *, tm_max=1024):
    """x: (B, C, H, W).  Returns (B, output_shape)."""
    w1_p, b1_p, w2_p, b2_p = padded_params
    d_in, hidden, d_out = dims

    B = x.shape[0]
    x_flat = x.reshape(B, -1)                   # nn.Flatten (row-major, matches torch)
    assert x_flat.shape[1] == d_in

    d_in_p, hid_p = w1_p.shape
    d_out_p = w2_p.shape[1]

    # Only the K dim of GEMM 1 may need a per-call pad (to match padded W1);
    # the batch dim is handled raggedly by a cdiv grid — no padding at all.
    if d_in_p != d_in:
        x_flat = jnp.pad(x_flat, ((0, 0), (0, d_in_p - d_in)))

    data_budget, vmem_limit = _vmem_budget_bytes()
    itemsize = x_flat.dtype.itemsize

    # --- batch tile: multiple of 8, up to tm_max, floored at 256 (MXU height) --
    tm = min(_round_up(B, _SUBLANE), _round_up(tm_max, _SUBLANE))
    tm_floor = min(tm, 256)
    # Single-buffered resident weights + biases.
    weight_bytes = 4 * (d_in_p * hid_p + hid_p * d_out_p + hid_p + d_out_p)

    def _resident_bytes(t):
        io = 2 * itemsize * t * (d_in_p + d_out_p)      # double-buffered x / out tiles
        live = 4 * t * (hid_p + d_out_p)                # f32 hidden + f32 out (pre-cast)
        return weight_bytes + io + live

    while tm > tm_floor and _resident_bytes(tm) > data_budget:
        tm = _round_up(tm // 2, _SUBLANE)
    tm = max(_SUBLANE, tm)

    grid_m = pl.cdiv(B, tm)
    out_shape = jax.ShapeDtypeStruct((B, d_out_p), x.dtype)

    if _resident_bytes(tm) <= data_budget:
        # -------- fast path: both weight matrices resident in VMEM --------
        def _call(single_buffer_weights):
            wkw = ({"pipeline_mode": pl.Buffered(1)}
                   if single_buffer_weights else {})
            return pl.pallas_call(
                _mlp_kernel,
                out_shape=out_shape,
                grid_spec=pltpu.PrefetchScalarGridSpec(
                    num_scalar_prefetch=0,
                    grid=(grid_m,),
                    in_specs=[
                        pl.BlockSpec((tm, d_in_p), lambda i: (i, 0)),           # x tile
                        pl.BlockSpec((d_in_p, hid_p), lambda i: (0, 0), **wkw),  # W1
                        pl.BlockSpec((1, hid_p), lambda i: (0, 0), **wkw),       # b1
                        pl.BlockSpec((hid_p, d_out_p), lambda i: (0, 0), **wkw),  # W2
                        pl.BlockSpec((1, d_out_p), lambda i: (0, 0), **wkw),      # b2
                    ],
                    out_specs=pl.BlockSpec((tm, d_out_p), lambda i: (i, 0)),    # lane-dense
                ),
                compiler_params=pltpu.CompilerParams(
                    dimension_semantics=("parallel",),
                    vmem_limit_bytes=int(vmem_limit),
                ),
            )(x_flat, w1_p, b1_p, w2_p, b2_p)

        try:
            out_p = _call(single_buffer_weights=True)
        except Exception:
            # pipeline_mode=Buffered(1) unsupported on this jax build: fall back
            # to default double-buffered constant blocks (correctness identical).
            out_p = _call(single_buffer_weights=False)
        return out_p[:, :d_out]

    # -------- fallback path: weights too big to stay resident (e.g. v7x) ------
    def _ktiled_bytes(t, k):
        io = 2 * itemsize * t * (d_in_p + d_out_p)                 # x / out tiles (2x)
        w = 2 * 4 * (d_in_p * k + k * d_out_p + k) + 4 * d_out_p   # W1/b1/W2 tiles (2x) + b2
        live = 4 * t * k + 2 * 4 * t * d_out_p                     # f32 h tile + partial + acc
        return io + w + live

    tk = hid_p
    while tk > _LANE and (hid_p % tk != 0 or _ktiled_bytes(tm, tk) > data_budget):
        tk -= _LANE                                   # tk always ends up dividing hid_p
    while tm > _SUBLANE and _ktiled_bytes(tm, tk) > data_budget:
        tm = _round_up(tm // 2, _SUBLANE)
    grid_m = pl.cdiv(B, tm)

    out_p = pl.pallas_call(
        _mlp_kernel_ktiled,
        out_shape=out_shape,
        grid_spec=pltpu.PrefetchScalarGridSpec(
            num_scalar_prefetch=0,
            grid=(grid_m, hid_p // tk),
            in_specs=[
                pl.BlockSpec((tm, d_in_p), lambda i, k: (i, 0)),    # x tile
                pl.BlockSpec((d_in_p, tk), lambda i, k: (0, k)),    # W1 column tile
                pl.BlockSpec((1, tk), lambda i, k: (0, k)),         # b1 tile
                pl.BlockSpec((tk, d_out_p), lambda i, k: (k, 0)),   # W2 row tile
                pl.BlockSpec((1, d_out_p), lambda i, k: (0, 0)),    # b2 (resident)
            ],
            out_specs=pl.BlockSpec((tm, d_out_p), lambda i, k: (i, 0)),
            scratch_shapes=[pltpu.VMEM((tm, d_out_p), jnp.float32)],
        ),
        compiler_params=pltpu.CompilerParams(
            dimension_semantics=("parallel", "arbitrary"),
            vmem_limit_bytes=int(vmem_limit),
        ),
    )(x_flat, w1_p, b1_p, w2_p, b2_p)
    return out_p[:, :d_out]


def baseline_model_apply(x, w1, b1, w2, b2):
    """Convenience: pad params then run (prefer prepare_params once + forward)."""
    padded, dims = prepare_params(w1, b1, w2, b2)
    return baseline_model_forward(x, padded, dims)


def init_params(key, input_shape, hidden_units, output_shape, dtype=jnp.float32):
    """PyTorch-style uniform(+-1/sqrt(fan_in)) init; weights stored as (in, out)."""
    k1, k2, k3, k4 = jax.random.split(key, 4)
    lim1 = 1.0 / (input_shape ** 0.5)
    lim2 = 1.0 / (hidden_units ** 0.5)
    w1 = jax.random.uniform(k1, (input_shape, hidden_units), dtype, -lim1, lim1)
    b1 = jax.random.uniform(k2, (hidden_units,), dtype, -lim1, lim1)
    w2 = jax.random.uniform(k3, (hidden_units, output_shape), dtype, -lim2, lim2)
    b2 = jax.random.uniform(k4, (output_shape,), dtype, -lim2, lim2)
    return w1, b1, w2, b2


if __name__ == "__main__":
    # Small, module-consistent shapes: x is (B=2, C=1, H=8, W=8) NCHW,
    # so input_shape = 1*8*8 = 64, hidden_units = 32, output_shape = 10.
    B, C, H, W = 2, 1, 8, 8
    input_shape = C * H * W
    hidden_units = 32
    output_shape = 10

    key = jax.random.PRNGKey(0)
    kx, kp = jax.random.split(key)
    x = jax.random.normal(kx, (B, C, H, W), dtype=jnp.float32)
    w1, b1, w2, b2 = init_params(kp, input_shape, hidden_units, output_shape)

    padded_params, dims = prepare_params(w1, b1, w2, b2)   # one-time padding
    out = baseline_model_forward(x, padded_params, dims)
    out = jax.block_until_ready(out)

    # Pure-JAX reference of the same math.
    ref = x.reshape(B, -1) @ w1 + b1
    ref = ref @ w2 + b2
    assert out.shape == (B, output_shape)
    assert jnp.allclose(out, ref, atol=1e-5, rtol=1e-5)

    print("KERNEL_OK")
</pallas_src>

<mosaic_0001>
module attributes {stable_mosaic.version = 11 : i64} {
  func.func @_mlp_kernel(%arg0: i32, %arg1: memref<8x128xf32, #tpu.memory_space<vmem>>, %arg2: memref<128x128xf32, #tpu.memory_space<vmem>>, %arg3: memref<1x128xf32, #tpu.memory_space<vmem>>, %arg4: memref<128x128xf32, #tpu.memory_space<vmem>>, %arg5: memref<1x128xf32, #tpu.memory_space<vmem>>, %arg6: memref<8x128xf32, #tpu.memory_space<vmem>>) attributes {dimension_semantics = [#tpu.dimension_semantics<parallel>], iteration_bounds = array<i64: 1>, scalar_prefetch = 0 : i64, scratch_operands = 0 : i64, tpu.core_type = #tpu.core_type<tc>, window_params = [{transform_indices = @transform_0, window_bounds = array<i64: 8, 128>}, {pipeline_mode = #tpu.pipeline_mode<synchronous>, transform_indices = @transform_1, window_bounds = array<i64: 128, 128>}, {pipeline_mode = #tpu.pipeline_mode<synchronous>, transform_indices = @transform_2, window_bounds = array<i64: 1, 128>}, {pipeline_mode = #tpu.pipeline_mode<synchronous>, transform_indices = @transform_3, window_bounds = array<i64: 128, 128>}, {pipeline_mode = #tpu.pipeline_mode<synchronous>, transform_indices = @transform_4, window_bounds = array<i64: 1, 128>}, {transform_indices = @transform_5, window_bounds = array<i64: 8, 128>}]} {
    %c0 = arith.constant 0 : index
    %c0_0 = arith.constant 0 : index
    %0 = vector.load %arg1[%c0, %c0_0] : memref<8x128xf32, #tpu.memory_space<vmem>>, vector<8x128xf32>
    %c0_1 = arith.constant 0 : index
    %c0_2 = arith.constant 0 : index
    %1 = vector.load %arg2[%c0_1, %c0_2] : memref<128x128xf32, #tpu.memory_space<vmem>>, vector<128x128xf32>
    %cst = arith.constant dense<0.000000e+00> : vector<8x128xf32>
    %2 = tpu.matmul %0, %1, %cst {dimension_numbers = #tpu.dot_dimension_numbers<[1], [0], [0], [1], [0, 0, 1, 1], [], []>} : vector<8x128xf32>, vector<128x128xf32>, vector<8x128xf32> -> vector<8x128xf32>
    %c0_3 = arith.constant 0 : index
    %c0_4 = arith.constant 0 : index
    %3 = vector.load %arg3[%c0_3, %c0_4] : memref<1x128xf32, #tpu.memory_space<vmem>>, vector<1x128xf32>
    %4 = vector.broadcast %3 : vector<1x128xf32> to vector<8x128xf32>
    %5 = arith.addf %2, %4 : vector<8x128xf32>
    %c0_5 = arith.constant 0 : index
    %c0_6 = arith.constant 0 : index
    %6 = vector.load %arg4[%c0_5, %c0_6] : memref<128x128xf32, #tpu.memory_space<vmem>>, vector<128x128xf32>
    %cst_7 = arith.constant dense<0.000000e+00> : vector<8x128xf32>
    %7 = tpu.matmul %5, %6, %cst_7 {dimension_numbers = #tpu.dot_dimension_numbers<[1], [0], [0], [1], [0, 0, 1, 1], [], []>} : vector<8x128xf32>, vector<128x128xf32>, vector<8x128xf32> -> vector<8x128xf32>
    %c0_8 = arith.constant 0 : index
    %c0_9 = arith.constant 0 : index
    %8 = vector.load %arg5[%c0_8, %c0_9] : memref<1x128xf32, #tpu.memory_space<vmem>>, vector<1x128xf32>
    %9 = vector.broadcast %8 : vector<1x128xf32> to vector<8x128xf32>
    %10 = arith.addf %7, %9 : vector<8x128xf32>
    %c0_10 = arith.constant 0 : index
    %c0_11 = arith.constant 0 : index
    %11 = vector.load %arg6[%c0_10, %c0_11] : memref<8x128xf32, #tpu.memory_space<vmem>>, vector<8x128xf32>
    tpu.vector_store %arg6[%c0_10, %c0_11], %10 {strides = array<i32>} : memref<8x128xf32, #tpu.memory_space<vmem>>, vector<8x128xf32>,
    return
  }
  func.func @transform_0(%arg0: i32) -> (i32, i32) {
    %c0_i32 = arith.constant 0 : i32
    %c0_i32_0 = arith.constant 0 : i32
    return %arg0, %c0_i32 : i32, i32
  }
  func.func @transform_1(%arg0: i32) -> (i32, i32) {
    %c0_i32 = arith.constant 0 : i32
    %c0_i32_0 = arith.constant 0 : i32
    %c0_i32_1 = arith.constant 0 : i32
    return %c0_i32, %c0_i32_0 : i32, i32
  }
  func.func @transform_2(%arg0: i32) -> (i32, i32) {
    %c0_i32 = arith.constant 0 : i32
    %c0_i32_0 = arith.constant 0 : i32
    %c0_i32_1 = arith.constant 0 : i32
    return %c0_i32, %c0_i32_0 : i32, i32
  }
  func.func @transform_3(%arg0: i32) -> (i32, i32) {
    %c0_i32 = arith.constant 0 : i32
    %c0_i32_0 = arith.constant 0 : i32
    %c0_i32_1 = arith.constant 0 : i32
    return %c0_i32, %c0_i32_0 : i32, i32
  }
  func.func @transform_4(%arg0: i32) -> (i32, i32) {
    %c0_i32 = arith.constant 0 : i32
    %c0_i32_0 = arith.constant 0 : i32
    %c0_i32_1 = arith.constant 0 : i32
    return %c0_i32, %c0_i32_0 : i32, i32
  }
  func.func @transform_5(%arg0: i32) -> (i32, i32) {
    %c0_i32 = arith.constant 0 : i32
    %c0_i32_0 = arith.constant 0 : i32
    return %arg0, %c0_i32 : i32, i32
  }
}

module attributes {stable_mosaic.version = 11 : i64} {
  func.func @_mlp_kernel(%arg0: i32, %arg1: memref<8x128xf32, #tpu.memory_space<vmem>>, %arg2: memref<128x128xf32, #tpu.memory_space<vmem>>, %arg3: memref<1x128xf32, #tpu.memory_space<vmem>>, %arg4: memref<128x128xf32, #tpu.memory_space<vmem>>, %arg5: memref<1x128xf32, #tpu.memory_space<vmem>>, %arg6: memref<8x128xf32, #tpu.memory_space<vmem>>) attributes {dimension_semantics = [#tpu.dimension_semantics<parallel>], iteration_bounds = array<i64: 1>, scalar_prefetch = 0 : i64, scratch_operands = 0 : i64, tpu.core_type = #tpu.core_type<tc>, window_params = [{transform_indices = @transform_0, window_bounds = array<i64: 8, 128>}, {pipeline_mode = #tpu.pipeline_mode<synchronous>, transform_indices = @transform_1, window_bounds = array<i64: 128, 128>}, {pipeline_mode = #tpu.pipeline_mode<synchronous>, transform_indices = @transform_2, window_bounds = array<i64: 1, 128>}, {pipeline_mode = #tpu.pipeline_mode<synchronous>, transform_indices = @transform_3, window_bounds = array<i64: 128, 128>}, {pipeline_mode = #tpu.pipeline_mode<synchronous>, transform_indices = @transform_4, window_bounds = array<i64: 1, 128>}, {transform_indices = @transform_5, window_bounds = array<i64: 8, 128>}]} {
    %c0 = arith.constant 0 : index
    %c0_0 = arith.constant 0 : index
    %0 = vector.load %arg1[%c0, %c0_0] : memref<8x128xf32, #tpu.memory_space<vmem>>, vector<8x128xf32>
    %c0_1 = arith.constant 0 : index
    %c0_2 = arith.constant 0 : index
    %1 = vector.load %arg2[%c0_1, %c0_2] : memref<128x128xf32, #tpu.memory_space<vmem>>, vector<128x128xf32>
    %cst = arith.constant dense<0.000000e+00> : vector<8x128xf32>
    %2 = tpu.matmul %0, %1, %cst {dimension_numbers = #tpu.dot_dimension_numbers<[1], [0], [0], [1], [0, 0, 1, 1], [], []>} : vector<8x128xf32>, vector<128x128xf32>, vector<8x128xf32> -> vector<8x128xf32>
    %c0_3 = arith.constant 0 : index
    %c0_4 = arith.constant 0 : index
    %3 = vector.load %arg3[%c0_3, %c0_4] : memref<1x128xf32, #tpu.memory_space<vmem>>, vector<1x128xf32>
    %4 = vector.broadcast %3 : vector<1x128xf32> to vector<8x128xf32>
    %5 = arith.addf %2, %4 : vector<8x128xf32>
    %c0_5 = arith.constant 0 : index
    %c0_6 = arith.constant 0 : index
    %6 = vector.load %arg4[%c0_5, %c0_6] : memref<128x128xf32, #tpu.memory_space<vmem>>, vector<128x128xf32>
    %cst_7 = arith.constant dense<0.000000e+00> : vector<8x128xf32>
    %7 = tpu.matmul %5, %6, %cst_7 {dimension_numbers = #tpu.dot_dimension_numbers<[1], [0], [0], [1], [0, 0, 1, 1], [], []>} : vector<8x128xf32>, vector<128x128xf32>, vector<8x128xf32> -> vector<8x128xf32>
    %c0_8 = arith.constant 0 : index
    %c0_9 = arith.constant 0 : index
    %8 = vector.load %arg5[%c0_8, %c0_9] : memref<1x128xf32, #tpu.memory_space<vmem>>, vector<1x128xf32>
    %9 = vector.broadcast %8 : vector<1x128xf32> to vector<8x128xf32>
    %10 = arith.addf %7, %9 : vector<8x128xf32>
    %c0_10 = arith.constant 0 : index
    %c0_11 = arith.constant 0 : index
    %11 = vector.load %arg6[%c0_10, %c0_11] : memref<8x128xf32, #tpu.memory_space<vmem>>, vector<8x128xf32>
    tpu.vector_store %arg6[%c0_10, %c0_11], %10 {strides = array<i32>} : memref<8x128xf32, #tpu.memory_space<vmem>>, vector<8x128xf32>,
    return
  }
  func.func @transform_0(%arg0: i32) -> (i32, i32) {
    %c0_i32 = arith.constant 0 : i32
    %c0_i32_0 = arith.constant 0 : i32
    return %arg0, %c0_i32 : i32, i32
  }
  func.func @transform_1(%arg0: i32) -> (i32, i32) {
    %c0_i32 = arith.constant 0 : i32
    %c0_i32_0 = arith.constant 0 : i32
    %c0_i32_1 = arith.constant 0 : i32
    return %c0_i32, %c0_i32_0 : i32, i32
  }
  func.func @transform_2(%arg0: i32) -> (i32, i32) {
    %c0_i32 = arith.constant 0 : i32
    %c0_i32_0 = arith.constant 0 : i32
    %c0_i32_1 = arith.constant 0 : i32
    return %c0_i32, %c0_i32_0 : i32, i32
  }
  func.func @transform_3(%arg0: i32) -> (i32, i32) {
    %c0_i32 = arith.constant 0 : i32
    %c0_i32_0 = arith.constant 0 : i32
    %c0_i32_1 = arith.constant 0 : i32
    return %c0_i32, %c0_i32_0 : i32, i32
  }
  func.func @transform_4(%arg0: i32) -> (i32, i32) {
    %c0_i32 = arith.constant 0 : i32
    %c0_i32_0 = arith.constant 0 : i32
    %c0_i32_1 = arith.constant 0 : i32
    return %c0_i32, %c0_i32_0 : i32, i32
  }
  func.func @transform_5(%arg0: i32) -> (i32, i32) {
    %c0_i32 = arith.constant 0 : i32
    %c0_i32_0 = arith.constant 0 : i32
    return %arg0, %c0_i32 : i32, i32
  }
}

</mosaic_0001>

<llo_original>
// kernel: tpu_custom_call.1
$region0: #{tpu_custom_call.1}
  #allocation0 [shape = 'u32[]', space=smem, size = 0x4, offset = 0x4, fixed_abs, tag = 'smem constant byte address 0x4 - core index']
  #allocation1 [shape = 'u32[144,128]{1,0:T(1,128)}', space=vmem, size = 0x12000, scoped, tag = 'internal scratch']
  %s0 = inlined_call_operand.hbm [shape: f32[2,128], index: 0, kind: input, shape index: {}]
  %s1 = inlined_call_operand.hbm [shape: f32[128,128], index: 1, kind: input, shape index: {}]
  %s2 = inlined_call_operand.vmem [shape: f32[1,128], index: 2, kind: input, shape index: {}]
  %s3 = inlined_call_operand.hbm [shape: f32[128,128], index: 3, kind: input, shape index: {}]
  %s4 = inlined_call_operand.vmem [shape: f32[1,128], index: 4, kind: input, shape index: {}]
  %s5 = inlined_call_operand.hbm [shape: f32[2,128], index: 5, kind: output, shape index: {}]
  %s6 = sld [smem:[#allocation0]]
  $region42: #{tpu_custom_call.1} parent=0
    _
  %s8 = ssub.s32 1, %s6
  %s9 = scalar_select 0, %s8, %s6
  $region1: #{tpu_custom_call.1} parent=0
    #allocation2 [shape = 'u8[4096]{0}', space=vmem, size = 0x1000, scoped, tag = 'input window, operand 0, single buffered']
    #allocation3 [shape = 's32[1]{0}', space=sflag, size = 0x4, scoped, tag = 'scoped memory for tpu_custom_call.1']
    #allocation4 [shape = 's32[1]{0}', space=sflag, size = 0x4, scoped, tag = 'scoped memory for tpu_custom_call.1']
    #allocation5 [shape = 'u8[65536]{0}', space=vmem, size = 0x10000, scoped, tag = 'input window, operand 1, single buffered']
    #allocation6 [shape = 's32[1]{0}', space=sflag, size = 0x4, scoped, tag = 'scoped memory for tpu_custom_call.1']
    #allocation7 [shape = 'u8[65536]{0}', space=vmem, size = 0x10000, scoped, tag = 'input window, operand 3, single buffered']
    #allocation8 [shape = 'u8[4096]{0}', space=vmem, size = 0x1000, scoped, tag = 'output window, operand 0, single buffered']
    %10 = vsyncpa [#allocation3], 0
    %11 = vsyncpa [#allocation6], 0
    %12 = vsyncpa [#allocation4], 0
    // Predicated region
    $region2: #{tpu_custom_call.1} parent=1 // pred_check
      _
    $region3: #{tpu_custom_call.1} parent=1 // pred_check_branch
      %14 = sbr.rel (0) target = $region5
    $region4: #{tpu_custom_call.1} parent=1 // pred_region
      %s16 = ssub.s32 128, 32
      %17 = vsyncadd [#allocation3], %s16
      %s18 = sshll.u32 [#allocation2], 4
      %s19 = int_to_ptr.vmem [resolvable:$true] %s18
      %24 = dma.hbm_to_vmem [thread:$0]  %s0, 32, %s19, [#allocation3], 32, 32, 2
    $region5: #{tpu_custom_call.1} parent=1 // pred_fallthru
      _
    // Predicated region
    $region6: #{tpu_custom_call.1} parent=1 // pred_check
      _
    $region7: #{tpu_custom_call.1} parent=1 // pred_check_branch
      %26 = sbr.rel (0) target = $region9
    $region8: #{tpu_custom_call.1} parent=1 // pred_region
      %s28 = ssub.s32 2048, 2048
      %29 = vsyncadd [#allocation6], %s28
      %s30 = sshll.u32 [#allocation5], 4
      %s31 = int_to_ptr.vmem [resolvable:$true] %s30
      %36 = dma.hbm_to_vmem [thread:$0]  %s1, 2048, %s31, [#allocation6], 128, 128, 8
    $region9: #{tpu_custom_call.1} parent=1 // pred_fallthru
      _
    // Predicated region
    $region10: #{tpu_custom_call.1} parent=1 // pred_check
      _
    $region11: #{tpu_custom_call.1} parent=1 // pred_check_branch
      %38 = sbr.rel (0) target = $region13
    $region12: #{tpu_custom_call.1} parent=1 // pred_region
      _
    $region13: #{tpu_custom_call.1} parent=1 // pred_fallthru
      _
    // Predicated region
    $region14: #{tpu_custom_call.1} parent=1 // pred_check
      _
    $region15: #{tpu_custom_call.1} parent=1 // pred_check_branch
      %40 = sbr.rel (0) target = $region17
    $region16: #{tpu_custom_call.1} parent=1 // pred_region
      %s42 = ssub.s32 2048, 2048
      %43 = vsyncadd [#allocation6], %s42
      %s44 = sshll.u32 [#allocation7], 4
      %s45 = int_to_ptr.vmem [resolvable:$true] %s44
      %50 = dma.hbm_to_vmem [thread:$0]  %s3, 2048, %s45, [#allocation6], 128, 128, 8
    $region17: #{tpu_custom_call.1} parent=1 // pred_fallthru
      _
    // Predicated region
    $region18: #{tpu_custom_call.1} parent=1 // pred_check
      _
    $region19: #{tpu_custom_call.1} parent=1 // pred_check_branch
      %52 = sbr.rel (0) target = $region21
    $region20: #{tpu_custom_call.1} parent=1 // pred_region
      _
    $region21: #{tpu_custom_call.1} parent=1 // pred_fallthru
      _
    // Predicated region
    $region22: #{tpu_custom_call.1} parent=1 // pred_check
      _
    $region23: #{tpu_custom_call.1} parent=1 // pred_check_branch
      %54 = sbr.rel (0) target = $region25
    $region24: #{tpu_custom_call.1} parent=1 // pred_region
      %55 = dma.done [#allocation3], 128
    $region25: #{tpu_custom_call.1} parent=1 // pred_fallthru
      _
    // Predicated region
    $region26: #{tpu_custom_call.1} parent=1 // pred_check
      _
    $region27: #{tpu_custom_call.1} parent=1 // pred_check_branch
      %57 = sbr.rel (0) target = $region29
    $region28: #{tpu_custom_call.1} parent=1 // pred_region
      %58 = dma.done [#allocation6], 2048
    $region29: #{tpu_custom_call.1} parent=1 // pred_fallthru
      _
    // Predicated region
    $region30: #{tpu_custom_call.1} parent=1 // pred_check
      _
    $region31: #{tpu_custom_call.1} parent=1 // pred_check_branch
      %60 = sbr.rel (0) target = $region33
    $region32: #{tpu_custom_call.1} parent=1 // pred_region
      %61 = dma.done [#allocation6], 2048
    $region33: #{tpu_custom_call.1} parent=1 // pred_fallthru
      _
    %v62 = vld [vmem:[#allocation2] sm:$0xff]
    %v63 = vld [vmem:[#allocation5] sm:$0xff]
    %v64 = vld [vmem:[#allocation5 + $0x8] sm:$0xff]
    %v65 = vld [vmem:[#allocation5 + $0x10] sm:$0xff]
    %v66 = vld [vmem:[#allocation5 + $0x18] sm:$0xff]
    %v67 = vld [vmem:[#allocation5 + $0x20] sm:$0xff]
    %v68 = vld [vmem:[#allocation5 + $0x28] sm:$0xff]
    %v69 = vld [vmem:[#allocation5 + $0x30] sm:$0xff]
    %v70 = vld [vmem:[#allocation5 + $0x38] sm:$0xff]
    %v71 = vld [vmem:[#allocation5 + $0x40] sm:$0xff]
    %v72 = vld [vmem:[#allocation5 + $0x48] sm:$0xff]
    %v73 = vld [vmem:[#allocation5 + $0x50] sm:$0xff]
    %v74 = vld [vmem:[#allocation5 + $0x58] sm:$0xff]
    %v75 = vld [vmem:[#allocation5 + $0x60] sm:$0xff]
    %v76 = vld [vmem:[#allocation5 + $0x68] sm:$0xff]
    %v77 = vld [vmem:[#allocation5 + $0x70] sm:$0xff]
    %v78 = vld [vmem:[#allocation5 + $0x78] sm:$0xff]
    %v79 = vld [vmem:[%s2] sm:$0x1]
    %v81 = vlaneseq
    %v82 = vshrl.u32 %v81, 7
    %v83 = vsub.s32 0, %v82
    %v84 = vrot.slane %v79, %v83
    %86 = vmatprep.subr.mxu0 0.0
    %87 = vmatpush1.msra.mxu0 %v63
    %88 = vmatprep.subr.mxu0 0.0
    %89 = vmatpush1.msra.mxu0 %v64
    %90 = vmatprep.subr.mxu0 0.0
    %91 = vmatpush1.msra.mxu0 %v65
    %92 = vmatprep.subr.mxu0 0.0
    %93 = vmatpush1.msra.mxu0 %v66
    %94 = vmatprep.subr.mxu0 0.0
    %95 = vmatpush1.msra.mxu0 %v67
    %96 = vmatprep.subr.mxu0 0.0
    %97 = vmatpush1.msra.mxu0 %v68
    %98 = vmatprep.subr.mxu0 0.0
    %99 = vmatpush1.msra.mxu0 %v69
    %100 = vmatprep.subr.mxu0 0.0
    %101 = vmatpush1.msra.mxu0 %v70
    %102 = vmatprep.subr.mxu0 0.0
    %103 = vmatpush1.msra.mxu0 %v71
    %104 = vmatprep.subr.mxu0 0.0
    %105 = vmatpush1.msra.mxu0 %v72
    %106 = vmatprep.subr.mxu0 0.0
    %107 = vmatpush1.msra.mxu0 %v73
    %108 = vmatprep.subr.mxu0 0.0
    %109 = vmatpush1.msra.mxu0 %v74
    %110 = vmatprep.subr.mxu0 0.0
    %111 = vmatpush1.msra.mxu0 %v75
    %112 = vmatprep.subr.mxu0 0.0
    %113 = vmatpush1.msra.mxu0 %v76
    %114 = vmatprep.subr.mxu0 0.0
    %115 = vmatpush1.msra.mxu0 %v77
    %116 = vmatprep.subr.mxu0 0.0
    %117 = vmatpush1.msra.mxu0 %v78
    %118 = vmatprep.subr.mxu0 0.0
    %119 = vmatpush1.msra.mxu0 0.0
    %120 = vmatprep.subr.mxu0 0.0
    %121 = vmatpush1.msra.mxu0 0.0
    %122 = vmatprep.subr.mxu0 0.0
    %123 = vmatpush1.msra.mxu0 0.0
    %124 = vmatprep.subr.mxu0 0.0
    %125 = vmatpush1.msra.mxu0 0.0
    %126 = vmatprep.subr.mxu0 0.0
    %127 = vmatpush1.msra.mxu0 0.0
    %128 = vmatprep.subr.mxu0 0.0
    %129 = vmatpush1.msra.mxu0 0.0
    %130 = vmatprep.subr.mxu0 0.0
    %131 = vmatpush1.msra.mxu0 0.0
    %132 = vmatprep.subr.mxu0 0.0
    %133 = vmatpush1.msra.mxu0 0.0
    %134 = vmatprep.subr.mxu0 0.0
    %135 = vmatpush1.msra.mxu0 0.0
    %136 = vmatprep.subr.mxu0 0.0
    %137 = vmatpush1.msra.mxu0 0.0
    %138 = vmatprep.subr.mxu0 0.0
    %139 = vmatpush1.msra.mxu0 0.0
    %140 = vmatprep.subr.mxu0 0.0
    %141 = vmatpush1.msra.mxu0 0.0
    %142 = vmatprep.subr.mxu0 0.0
    %143 = vmatpush1.msra.mxu0 0.0
    %144 = vmatprep.subr.mxu0 0.0
    %145 = vmatpush1.msra.mxu0 0.0
    %146 = vmatprep.subr.mxu0 0.0
    %147 = vmatpush1.msra.mxu0 0.0
    %148 = vmatprep.subr.mxu0 0.0
    %149 = vmatpush1.msra.mxu0 0.0
    %150 = vmatprep.mubr.f32.mxu0 0.0
    %151 = vmatmul.mubr.f32.gmra.mrb[0].mxu0 %v62
    %v152 = vpop.f32.mrb[0].mxu0
    %v153 = vadd.f32 %v84, %v152
    %v154 = vpop.f32.mrb[0].mxu0
    %155 = vdwg.mxu0
    %v156 = vld [vmem:[#allocation7] sm:$0xff]
    %v157 = vld [vmem:[#allocation7 + $0x8] sm:$0xff]
    %v158 = vld [vmem:[#allocation7 + $0x10] sm:$0xff]
    %v159 = vld [vmem:[#allocation7 + $0x18] sm:$0xff]
    %v160 = vld [vmem:[#allocation7 + $0x20] sm:$0xff]
    %v161 = vld [vmem:[#allocation7 + $0x28] sm:$0xff]
    %v162 = vld [vmem:[#allocation7 + $0x30] sm:$0xff]
    %v163 = vld [vmem:[#allocation7 + $0x38] sm:$0xff]
    %v164 = vld [vmem:[#allocation7 + $0x40] sm:$0xff]
    %v165 = vld [vmem:[#allocation7 + $0x48] sm:$0xff]
    %v166 = vld [vmem:[#allocation7 + $0x50] sm:$0xff]
    %v167 = vld [vmem:[#allocation7 + $0x58] sm:$0xff]
    %v168 = vld [vmem:[#allocation7 + $0x60] sm:$0xff]
    %v169 = vld [vmem:[#allocation7 + $0x68] sm:$0xff]
    %v170 = vld [vmem:[#allocation7 + $0x70] sm:$0xff]
    %v171 = vld [vmem:[#allocation7 + $0x78] sm:$0xff]
    %v172 = vld [vmem:[%s4] sm:$0x1]
    %v174 = vlaneseq
    %v175 = vshrl.u32 %v174, 7
    %v176 = vsub.s32 0, %v175
    %v177 = vrot.slane %v172, %v176
    %179 = vmatprep.subr.mxu0 0.0
    %180 = vmatpush1.msra.mxu0 %v156
    %181 = vmatprep.subr.mxu0 0.0
    %182 = vmatpush1.msra.mxu0 %v157
    %183 = vmatprep.subr.mxu0 0.0
    %184 = vmatpush1.msra.mxu0 %v158
    %185 = vmatprep.subr.mxu0 0.0
    %186 = vmatpush1.msra.mxu0 %v159
    %187 = vmatprep.subr.mxu0 0.0
    %188 = vmatpush1.msra.mxu0 %v160
    %189 = vmatprep.subr.mxu0 0.0
    %190 = vmatpush1.msra.mxu0 %v161
    %191 = vmatprep.subr.mxu0 0.0
    %192 = vmatpush1.msra.mxu0 %v162
    %193 = vmatprep.subr.mxu0 0.0
    %194 = vmatpush1.msra.mxu0 %v163
    %195 = vmatprep.subr.mxu0 0.0
    %196 = vmatpush1.msra.mxu0 %v164
    %197 = vmatprep.subr.mxu0 0.0
    %198 = vmatpush1.msra.mxu0 %v165
    %199 = vmatprep.subr.mxu0 0.0
    %200 = vmatpush1.msra.mxu0 %v166
    %201 = vmatprep.subr.mxu0 0.0
    %202 = vmatpush1.msra.mxu0 %v167
    %203 = vmatprep.subr.mxu0 0.0
    %204 = vmatpush1.msra.mxu0 %v168
    %205 = vmatprep.subr.mxu0 0.0
    %206 = vmatpush1.msra.mxu0 %v169
    %207 = vmatprep.subr.mxu0 0.0
    %208 = vmatpush1.msra.mxu0 %v170
    %209 = vmatprep.subr.mxu0 0.0
    %210 = vmatpush1.msra.mxu0 %v171
    %211 = vmatprep.subr.mxu0 0.0
    %212 = vmatpush1.msra.mxu0 0.0
    %213 = vmatprep.subr.mxu0 0.0
    %214 = vmatpush1.msra.mxu0 0.0
    %215 = vmatprep.subr.mxu0 0.0
    %216 = vmatpush1.msra.mxu0 0.0
    %217 = vmatprep.subr.mxu0 0.0
    %218 = vmatpush1.msra.mxu0 0.0
    %219 = vmatprep.subr.mxu0 0.0
    %220 = vmatpush1.msra.mxu0 0.0
    %221 = vmatprep.subr.mxu0 0.0
    %222 = vmatpush1.msra.mxu0 0.0
    %223 = vmatprep.subr.mxu0 0.0
    %224 = vmatpush1.msra.mxu0 0.0
    %225 = vmatprep.subr.mxu0 0.0
    %226 = vmatpush1.msra.mxu0 0.0
    %227 = vmatprep.subr.mxu0 0.0
    %228 = vmatpush1.msra.mxu0 0.0
    %229 = vmatprep.subr.mxu0 0.0
    %230 = vmatpush1.msra.mxu0 0.0
    %231 = vmatprep.subr.mxu0 0.0
    %232 = vmatpush1.msra.mxu0 0.0
    %233 = vmatprep.subr.mxu0 0.0
    %234 = vmatpush1.msra.mxu0 0.0
    %235 = vmatprep.subr.mxu0 0.0
    %236 = vmatpush1.msra.mxu0 0.0
    %237 = vmatprep.subr.mxu0 0.0
    %238 = vmatpush1.msra.mxu0 0.0
    %239 = vmatprep.subr.mxu0 0.0
    %240 = vmatpush1.msra.mxu0 0.0
    %241 = vmatprep.subr.mxu0 0.0
    %242 = vmatpush1.msra.mxu0 0.0
    %243 = vmatprep.mubr.f32.mxu0 0.0
    %244 = vmatmul.mubr.f32.gmra.mrb[0].mxu0 %v153
    %v245 = vpop.f32.mrb[0].mxu0
    %v246 = vadd.f32 %v177, %v245
    %v247 = vpop.f32.mrb[0].mxu0
    %248 = vdwg.mxu0
    %249 = vst [vmem:[#allocation8] sm:$0xff] %v246
    // Predicated region
    $region34: #{tpu_custom_call.1} parent=1 // pred_check
      _
    $region35: #{tpu_custom_call.1} parent=1 // pred_check_branch
      %251 = sbr.rel (0) target = $region37
    $region36: #{tpu_custom_call.1} parent=1 // pred_region
      %s253 = ssub.s32 128, 32
      %254 = vsyncadd [#allocation4], %s253
      %s255 = sshll.u32 [#allocation8], 4
      %s256 = int_to_ptr.vmem [resolvable:$true] %s255
      %261 = dma.vmem_to_hbm [thread:$0]  %s256, 32, %s5, [#allocation4], 32, 32, 2
    $region37: #{tpu_custom_call.1} parent=1 // pred_fallthru
      _
    // Predicated region
    $region38: #{tpu_custom_call.1} parent=1 // pred_check
      _
    $region39: #{tpu_custom_call.1} parent=1 // pred_check_branch
      %263 = sbr.rel (0) target = $region41
    $region40: #{tpu_custom_call.1} parent=1 // pred_region
      %264 = dma.done [#allocation4], 128
    $region41: #{tpu_custom_call.1} parent=1 // pred_fallthru
      _
    %265 = vsyncpa [#allocation3], 1
    %266 = vsyncpa [#allocation6], 1
    %267 = vsyncpa [#allocation4], 1

// kernel: tpu_custom_call.1
$region0: #{tpu_custom_call.1}
  #allocation0 [shape = 'u32[]', space=smem, size = 0x4, offset = 0x4, fixed_abs, tag = 'smem constant byte address 0x4 - core index']
  #allocation1 [shape = 'u32[144,128]{1,0:T(1,128)}', space=vmem, size = 0x12000, scoped, tag = 'internal scratch']
  %s0 = inlined_call_operand.hbm [shape: f32[2,128], index: 0, kind: input, shape index: {}]
  %s1 = inlined_call_operand.hbm [shape: f32[128,128], index: 1, kind: input, shape index: {}]
  %s2 = inlined_call_operand.vmem [shape: f32[1,128], index: 2, kind: input, shape index: {}]
  %s3 = inlined_call_operand.hbm [shape: f32[128,128], index: 3, kind: input, shape index: {}]
  %s4 = inlined_call_operand.vmem [shape: f32[1,128], index: 4, kind: input, shape index: {}]
  %s5 = inlined_call_operand.hbm [shape: f32[2,128], index: 5, kind: output, shape index: {}]
  %s6 = sld [smem:[#allocation0]]
  $region42: #{tpu_custom_call.1} parent=0
    _
  %s8 = ssub.s32 1, %s6
  %s9 = scalar_select 0, %s8, %s6
  $region1: #{tpu_custom_call.1} parent=0
    #allocation2 [shape = 'u8[4096]{0}', space=vmem, size = 0x1000, scoped, tag = 'input window, operand 0, single buffered']
    #allocation3 [shape = 's32[1]{0}', space=sflag, size = 0x4, scoped, tag = 'scoped memory for tpu_custom_call.1']
    #allocation4 [shape = 's32[1]{0}', space=sflag, size = 0x4, scoped, tag = 'scoped memory for tpu_custom_call.1']
    #allocation5 [shape = 'u8[65536]{0}', space=vmem, size = 0x10000, scoped, tag = 'input window, operand 1, single buffered']
    #allocation6 [shape = 's32[1]{0}', space=sflag, size = 0x4, scoped, tag = 'scoped memory for tpu_custom_call.1']
    #allocation7 [shape = 'u8[65536]{0}', space=vmem, size = 0x10000, scoped, tag = 'input window, operand 3, single buffered']
    #allocation8 [shape = 'u8[4096]{0}', space=vmem, size = 0x1000, scoped, tag = 'output window, operand 0, single buffered']
    %10 = vsyncpa [#allocation3], 0
    %11 = vsyncpa [#allocation6], 0
    %12 = vsyncpa [#allocation4], 0
    // Predicated region
    $region2: #{tpu_custom_call.1} parent=1 // pred_check
      _
    $region3: #{tpu_custom_call.1} parent=1 // pred_check_branch
      %14 = sbr.rel (0) target = $region5
    $region4: #{tpu_custom_call.1} parent=1 // pred_region
      %s16 = ssub.s32 128, 32
      %17 = vsyncadd [#allocation3], %s16
      %s18 = sshll.u32 [#allocation2], 4
      %s19 = int_to_ptr.vmem [resolvable:$true] %s18
      %24 = dma.hbm_to_vmem [thread:$0]  %s0, 32, %s19, [#allocation3], 32, 32, 2
    $region5: #{tpu_custom_call.1} parent=1 // pred_fallthru
      _
    // Predicated region
    $region6: #{tpu_custom_call.1} parent=1 // pred_check
      _
    $region7: #{tpu_custom_call.1} parent=1 // pred_check_branch
      %26 = sbr.rel (0) target = $region9
    $region8: #{tpu_custom_call.1} parent=1 // pred_region
      %s28 = ssub.s32 2048, 2048
      %29 = vsyncadd [#allocation6], %s28
      %s30 = sshll.u32 [#allocation5], 4
      %s31 = int_to_ptr.vmem [resolvable:$true] %s30
      %36 = dma.hbm_to_vmem [thread:$0]  %s1, 2048, %s31, [#allocation6], 128, 128, 8
    $region9: #{tpu_custom_call.1} parent=1 // pred_fallthru
      _
    // Predicated region
    $region10: #{tpu_custom_call.1} parent=1 // pred_check
      _
    $region11: #{tpu_custom_call.1} parent=1 // pred_check_branch
      %38 = sbr.rel (0) target = $region13
    $region12: #{tpu_custom_call.1} parent=1 // pred_region
      _
    $region13: #{tpu_custom_call.1} parent=1 // pred_fallthru
      _
    // Predicated region
    $region14: #{tpu_custom_call.1} parent=1 // pred_check
      _
    $region15: #{tpu_custom_call.1} parent=1 // pred_check_branch
      %40 = sbr.rel (0) target = $region17
    $region16: #{tpu_custom_call.1} parent=1 // pred_region
      %s42 = ssub.s32 2048, 2048
      %43 = vsyncadd [#allocation6], %s42
      %s44 = sshll.u32 [#allocation7], 4
      %s45 = int_to_ptr.vmem [resolvable:$true] %s44
      %50 = dma.hbm_to_vmem [thread:$0]  %s3, 2048, %s45, [#allocation6], 128, 128, 8
    $region17: #{tpu_custom_call.1} parent=1 // pred_fallthru
      _
    // Predicated region
    $region18: #{tpu_custom_call.1} parent=1 // pred_check
      _
    $region19: #{tpu_custom_call.1} parent=1 // pred_check_branch
      %52 = sbr.rel (0) target = $region21
    $region20: #{tpu_custom_call.1} parent=1 // pred_region
      _
    $region21: #{tpu_custom_call.1} parent=1 // pred_fallthru
      _
    // Predicated region
    $region22: #{tpu_custom_call.1} parent=1 // pred_check
      _
    $region23: #{tpu_custom_call.1} parent=1 // pred_check_branch
      %54 = sbr.rel (0) target = $region25
    $region24: #{tpu_custom_call.1} parent=1 // pred_region
      %55 = dma.done [#allocation3], 128
    $region25: #{tpu_custom_call.1} parent=1 // pred_fallthru
      _
    // Predicated region
    $region26: #{tpu_custom_call.1} parent=1 // pred_check
      _
    $region27: #{tpu_custom_call.1} parent=1 // pred_check_branch
      %57 = sbr.rel (0) target = $region29
    $region28: #{tpu_custom_call.1} parent=1 // pred_region
      %58 = dma.done [#allocation6], 2048
    $region29: #{tpu_custom_call.1} parent=1 // pred_fallthru
      _
    // Predicated region
    $region30: #{tpu_custom_call.1} parent=1 // pred_check
      _
    $region31: #{tpu_custom_call.1} parent=1 // pred_check_branch
      %60 = sbr.rel (0) target = $region33
    $region32: #{tpu_custom_call.1} parent=1 // pred_region
      %61 = dma.done [#allocation6], 2048
    $region33: #{tpu_custom_call.1} parent=1 // pred_fallthru
      _
    %v62 = vld [vmem:[#allocation2] sm:$0xff]
    %v63 = vld [vmem:[#allocation5] sm:$0xff]
    %v64 = vld [vmem:[#allocation5 + $0x8] sm:$0xff]
    %v65 = vld [vmem:[#allocation5 + $0x10] sm:$0xff]
    %v66 = vld [vmem:[#allocation5 + $0x18] sm:$0xff]
    %v67 = vld [vmem:[#allocation5 + $0x20] sm:$0xff]
    %v68 = vld [vmem:[#allocation5 + $0x28] sm:$0xff]
    %v69 = vld [vmem:[#allocation5 + $0x30] sm:$0xff]
    %v70 = vld [vmem:[#allocation5 + $0x38] sm:$0xff]
    %v71 = vld [vmem:[#allocation5 + $0x40] sm:$0xff]
    %v72 = vld [vmem:[#allocation5 + $0x48] sm:$0xff]
    %v73 = vld [vmem:[#allocation5 + $0x50] sm:$0xff]
    %v74 = vld [vmem:[#allocation5 + $0x58] sm:$0xff]
    %v75 = vld [vmem:[#allocation5 + $0x60] sm:$0xff]
    %v76 = vld [vmem:[#allocation5 + $0x68] sm:$0xff]
    %v77 = vld [vmem:[#allocation5 + $0x70] sm:$0xff]
    %v78 = vld [vmem:[#allocation5 + $0x78] sm:$0xff]
    %v79 = vld [vmem:[%s2] sm:$0x1]
    %v81 = vlaneseq
    %v82 = vshrl.u32 %v81, 7
    %v83 = vsub.s32 0, %v82
    %v84 = vrot.slane %v79, %v83
    %86 = vmatprep.subr.mxu0 0.0
    %87 = vmatpush1.msra.mxu0 %v63
    %88 = vmatprep.subr.mxu0 0.0
    %89 = vmatpush1.msra.mxu0 %v64
    %90 = vmatprep.subr.mxu0 0.0
    %91 = vmatpush1.msra.mxu0 %v65
    %92 = vmatprep.subr.mxu0 0.0
    %93 = vmatpush1.msra.mxu0 %v66
    %94 = vmatprep.subr.mxu0 0.0
    %95 = vmatpush1.msra.mxu0 %v67
    %96 = vmatprep.subr.mxu0 0.0
    %97 = vmatpush1.msra.mxu0 %v68
    %98 = vmatprep.subr.mxu0 0.0
    %99 = vmatpush1.msra.mxu0 %v69
    %100 = vmatprep.subr.mxu0 0.0
    %101 = vmatpush1.msra.mxu0 %v70
    %102 = vmatprep.subr.mxu0 0.0
    %103 = vmatpush1.msra.mxu0 %v71
    %104 = vmatprep.subr.mxu0 0.0
    %105 = vmatpush1.msra.mxu0 %v72
    %106 = vmatprep.subr.mxu0 0.0
    %107 = vmatpush1.msra.mxu0 %v73
    %108 = vmatprep.subr.mxu0 0.0
    %109 = vmatpush1.msra.mxu0 %v74
    %110 = vmatprep.subr.mxu0 0.0
    %111 = vmatpush1.msra.mxu0 %v75
    %112 = vmatprep.subr.mxu0 0.0
    %113 = vmatpush1.msra.mxu0 %v76
    %114 = vmatprep.subr.mxu0 0.0
    %115 = vmatpush1.msra.mxu0 %v77
    %116 = vmatprep.subr.mxu0 0.0
    %117 = vmatpush1.msra.mxu0 %v78
    %118 = vmatprep.subr.mxu0 0.0
    %119 = vmatpush1.msra.mxu0 0.0
    %120 = vmatprep.subr.mxu0 0.0
    %121 = vmatpush1.msra.mxu0 0.0
    %122 = vmatprep.subr.mxu0 0.0
    %123 = vmatpush1.msra.mxu0 0.0
    %124 = vmatprep.subr.mxu0 0.0
    %125 = vmatpush1.msra.mxu0 0.0
    %126 = vmatprep.subr.mxu0 0.0
    %127 = vmatpush1.msra.mxu0 0.0
    %128 = vmatprep.subr.mxu0 0.0
    %129 = vmatpush1.msra.mxu0 0.0
    %130 = vmatprep.subr.mxu0 0.0
    %131 = vmatpush1.msra.mxu0 0.0
    %132 = vmatprep.subr.mxu0 0.0
    %133 = vmatpush1.msra.mxu0 0.0
    %134 = vmatprep.subr.mxu0 0.0
    %135 = vmatpush1.msra.mxu0 0.0
    %136 = vmatprep.subr.mxu0 0.0
    %137 = vmatpush1.msra.mxu0 0.0
    %138 = vmatprep.subr.mxu0 0.0
    %139 = vmatpush1.msra.mxu0 0.0
    %140 = vmatprep.subr.mxu0 0.0
    %141 = vmatpush1.msra.mxu0 0.0
    %142 = vmatprep.subr.mxu0 0.0
    %143 = vmatpush1.msra.mxu0 0.0
    %144 = vmatprep.subr.mxu0 0.0
    %145 = vmatpush1.msra.mxu0 0.0
    %146 = vmatprep.subr.mxu0 0.0
    %147 = vmatpush1.msra.mxu0 0.0
    %148 = vmatprep.subr.mxu0 0.0
    %149 = vmatpush1.msra.mxu0 0.0
    %150 = vmatprep.mubr.f32.mxu0 0.0
    %151 = vmatmul.mubr.f32.gmra.mrb[0].mxu0 %v62
    %v152 = vpop.f32.mrb[0].mxu0
    %v153 = vadd.f32 %v84, %v152
    %v154 = vpop.f32.mrb[0].mxu0
    %155 = vdwg.mxu0
    %v156 = vld [vmem:[#allocation7] sm:$0xff]
    %v157 = vld [vmem:[#allocation7 + $0x8] sm:$0xff]
    %v158 = vld [vmem:[#allocation7 + $0x10] sm:$0xff]
    %v159 = vld [vmem:[#allocation7 + $0x18] sm:$0xff]
    %v160 = vld [vmem:[#allocation7 + $0x20] sm:$0xff]
    %v161 = vld [vmem:[#allocation7 + $0x28] sm:$0xff]
    %v162 = vld [vmem:[#allocation7 + $0x30] sm:$0xff]
    %v163 = vld [vmem:[#allocation7 + $0x38] sm:$0xff]
    %v164 = vld [vmem:[#allocation7 + $0x40] sm:$0xff]
    %v165 = vld [vmem:[#allocation7 + $0x48] sm:$0xff]
    %v166 = vld [vmem:[#allocation7 + $0x50] sm:$0xff]
    %v167 = vld [vmem:[#allocation7 + $0x58] sm:$0xff]
    %v168 = vld [vmem:[#allocation7 + $0x60] sm:$0xff]
    %v169 = vld [vmem:[#allocation7 + $0x68] sm:$0xff]
    %v170 = vld [vmem:[#allocation7 + $0x70] sm:$0xff]
    %v171 = vld [vmem:[#allocation7 + $0x78] sm:$0xff]
    %v172 = vld [vmem:[%s4] sm:$0x1]
    %v174 = vlaneseq
    %v175 = vshrl.u32 %v174, 7
    %v176 = vsub.s32 0, %v175
    %v177 = vrot.slane %v172, %v176
    %179 = vmatprep.subr.mxu0 0.0
    %180 = vmatpush1.msra.mxu0 %v156
    %181 = vmatprep.subr.mxu0 0.0
    %182 = vmatpush1.msra.mxu0 %v157
    %183 = vmatprep.subr.mxu0 0.0
    %184 = vmatpush1.msra.mxu0 %v158
    %185 = vmatprep.subr.mxu0 0.0
    %186 = vmatpush1.msra.mxu0 %v159
    %187 = vmatprep.subr.mxu0 0.0
    %188 = vmatpush1.msra.mxu0 %v160
    %189 = vmatprep.subr.mxu0 0.0
    %190 = vmatpush1.msra.mxu0 %v161
    %191 = vmatprep.subr.mxu0 0.0
    %192 = vmatpush1.msra.mxu0 %v162
    %193 = vmatprep.subr.mxu0 0.0
    %194 = vmatpush1.msra.mxu0 %v163
    %195 = vmatprep.subr.mxu0 0.0
    %196 = vmatpush1.msra.mxu0 %v164
    %197 = vmatprep.subr.mxu0 0.0
    %198 = vmatpush1.msra.mxu0 %v165
    %199 = vmatprep.subr.mxu0 0.0
    %200 = vmatpush1.msra.mxu0 %v166
    %201 = vmatprep.subr.mxu0 0.0
    %202 = vmatpush1.msra.mxu0 %v167
    %203 = vmatprep.subr.mxu0 0.0
    %204 = vmatpush1.msra.mxu0 %v168
    %205 = vmatprep.subr.mxu0 0.0
    %206 = vmatpush1.msra.mxu0 %v169
    %207 = vmatprep.subr.mxu0 0.0
    %208 = vmatpush1.msra.mxu0 %v170
    %209 = vmatprep.subr.mxu0 0.0
    %210 = vmatpush1.msra.mxu0 %v171
    %211 = vmatprep.subr.mxu0 0.0
    %212 = vmatpush1.msra.mxu0 0.0
    %213 = vmatprep.subr.mxu0 0.0
    %214 = vmatpush1.msra.mxu0 0.0
    %215 = vmatprep.subr.mxu0 0.0
    %216 = vmatpush1.msra.mxu0 0.0
    %217 = vmatprep.subr.mxu0 0.0
    %218 = vmatpush1.msra.mxu0 0.0
    %219 = vmatprep.subr.mxu0 0.0
    %220 = vmatpush1.msra.mxu0 0.0
    %221 = vmatprep.subr.mxu0 0.0
    %222 = vmatpush1.msra.mxu0 0.0
    %223 = vmatprep.subr.mxu0 0.0
    %224 = vmatpush1.msra.mxu0 0.0
    %225 = vmatprep.subr.mxu0 0.0
    %226 = vmatpush1.msra.mxu0 0.0
    %227 = vmatprep.subr.mxu0 0.0
    %228 = vmatpush1.msra.mxu0 0.0
    %229 = vmatprep.subr.mxu0 0.0
    %230 = vmatpush1.msra.mxu0 0.0
    %231 = vmatprep.subr.mxu0 0.0
    %232 = vmatpush1.msra.mxu0 0.0
    %233 = vmatprep.subr.mxu0 0.0
    %234 = vmatpush1.msra.mxu0 0.0
    %235 = vmatprep.subr.mxu0 0.0
    %236 = vmatpush1.msra.mxu0 0.0
    %237 = vmatprep.subr.mxu0 0.0
    %238 = vmatpush1.msra.mxu0 0.0
    %239 = vmatprep.subr.mxu0 0.0
    %240 = vmatpush1.msra.mxu0 0.0
    %241 = vmatprep.subr.mxu0 0.0
    %242 = vmatpush1.msra.mxu0 0.0
    %243 = vmatprep.mubr.f32.mxu0 0.0
    %244 = vmatmul.mubr.f32.gmra.mrb[0].mxu0 %v153
    %v245 = vpop.f32.mrb[0].mxu0
    %v246 = vadd.f32 %v177, %v245
    %v247 = vpop.f32.mrb[0].mxu0
    %248 = vdwg.mxu0
    %249 = vst [vmem:[#allocation8] sm:$0xff] %v246
    // Predicated region
    $region34: #{tpu_custom_call.1} parent=1 // pred_check
      _
    $region35: #{tpu_custom_call.1} parent=1 // pred_check_branch
      %251 = sbr.rel (0) target = $region37
    $region36: #{tpu_custom_call.1} parent=1 // pred_region
      %s253 = ssub.s32 128, 32
      %254 = vsyncadd [#allocation4], %s253
      %s255 = sshll.u32 [#allocation8], 4
      %s256 = int_to_ptr.vmem [resolvable:$true] %s255
      %261 = dma.vmem_to_hbm [thread:$0]  %s256, 32, %s5, [#allocation4], 32, 32, 2
    $region37: #{tpu_custom_call.1} parent=1 // pred_fallthru
      _
    // Predicated region
    $region38: #{tpu_custom_call.1} parent=1 // pred_check
      _
    $region39: #{tpu_custom_call.1} parent=1 // pred_check_branch
      %263 = sbr.rel (0) target = $region41
    $region40: #{tpu_custom_call.1} parent=1 // pred_region
      %264 = dma.done [#allocation4], 128
    $region41: #{tpu_custom_call.1} parent=1 // pred_fallthru
      _
    %265 = vsyncpa [#allocation3], 1
    %266 = vsyncpa [#allocation6], 1
    %267 = vsyncpa [#allocation4], 1

</llo_original>
